<compile_context>
chip_gen: v5e
topology: v5e:2x2
jax: 0.10.0
libtpu: 0.0.40
codegen_flags: <defaults>
</compile_context>

<pallas_src>
import jax
import jax.numpy as jnp
from jax import lax
from jax.experimental import pallas as pl
from jax.experimental.pallas import tpu as pltpu

_NCORES = 2  # leading "parallel" grid axis: 2 TensorCores on v7x, no-op on 1-TC chips


def _round_up(x, m):
    return ((x + m - 1) // m) * m


def _choose_tile_b(B, C, itemsize):
    """Pick a batch tile of ~2 MiB so 2 inputs x 2 pipeline buffers stay well
    under the smallest default scoped-VMEM limit (16 MiB on v5e)."""
    bytes_per_tile_target = 2 * 1024 * 1024
    tb = (bytes_per_tile_target // max(C * itemsize, 1)) // 8 * 8
    tb = min(tb, 1024)                                  # diminishing returns past ~1k rows
    tb = min(tb, _round_up(pl.cdiv(B, _NCORES), 8))     # don't over-cover small batches
    return int(max(8, tb))


def _make_bce_aw_kernel(alpha, B, tile_b, tiles_per_core, eps=1e-9):
    # alpha specialized at trace time: -alpha / -(1-alpha) are compile-time constants.
    neg_alpha = -float(alpha)
    neg_one_minus_alpha = -(1.0 - float(alpha))

    def kernel(logits_ref, target_ref, acc_ref):
        c = pl.program_id(0)  # "parallel" core axis
        i = pl.program_id(1)  # "arbitrary" reduction axis over batch tiles

        @pl.when(i == 0)
        def _init():
            acc_ref[...] = jnp.zeros_like(acc_ref)

        logits = logits_ref[...].astype(jnp.float32)
        t = target_ref[...].astype(jnp.float32)

        # Two-term form preserved (exact for soft labels, keeps NaN propagation
        # identical to the torch reference). Kernel is HBM-bound, not EUP-bound.
        loss = (neg_alpha * t) * (1.0 - logits) * jnp.log(logits + eps)
        loss = loss + (neg_one_minus_alpha * (1.0 - t)) * logits * jnp.log(1.0 - logits + eps)

        # Ragged batch handled WITHOUT padding the inputs: rows past B (garbage
        # in a partially out-of-bounds tile) are masked out by global row index.
        row_start = (c * tiles_per_core + i) * tile_b
        rows = row_start + lax.broadcasted_iota(jnp.int32, loss.shape, 0)
        valid = (rows < B) & jnp.logical_not(jnp.isnan(loss))

        part_sum = jnp.sum(jnp.where(valid, loss, 0.0))
        part_cnt = jnp.sum(valid.astype(jnp.float32))

        # Pack the two scalars into a lane-dense (8,128) update so the resident
        # accumulator is touched with full-block (unmasked) loads/stores:
        #   acc[0,0] += part_sum ; acc[0,1] += part_cnt
        sub = lax.broadcasted_iota(jnp.int32, acc_ref.shape, 0)
        lane = lax.broadcasted_iota(jnp.int32, acc_ref.shape, 1)
        upd = jnp.where((sub == 0) & (lane == 0), part_sum,
                        jnp.where((sub == 0) & (lane == 1), part_cnt, 0.0))
        acc_ref[...] = acc_ref[...] + upd

    return kernel


def bce_aw_loss(logits, target, alpha=1.0):
    """Scalar nanmean of the asymmetric-weighted BCE loss (matches the torch module)."""
    assert logits.ndim == 2 and logits.shape == target.shape
    B, C = logits.shape

    tile_b = _choose_tile_b(B, C, jnp.dtype(logits.dtype).itemsize)
    tiles_per_core = max(1, pl.cdiv(B, _NCORES * tile_b))
    last_blk = (B - 1) // tile_b  # last block index that contains at least one valid row

    kernel = _make_bce_aw_kernel(alpha, B, tile_b, tiles_per_core)

    def in_map(c, i):
        # Clamp so no DMA window starts past the array end; clamped (fully-OOB)
        # tiles contribute zero because the in-kernel row mask is all-False.
        return (jnp.minimum(c * tiles_per_core + i, last_blk), 0)

    acc = pl.pallas_call(
        kernel,
        out_shape=jax.ShapeDtypeStruct((_NCORES * 8, 128), jnp.float32),
        grid=(_NCORES, tiles_per_core),
        in_specs=[
            pl.BlockSpec((tile_b, C), in_map),
            pl.BlockSpec((tile_b, C), in_map),
        ],
        out_specs=pl.BlockSpec((8, 128), lambda c, i: (c, 0)),
        compiler_params=pltpu.CompilerParams(
            dimension_semantics=("parallel", "arbitrary")),
    )(logits, target)

    total_sum = jnp.sum(acc[:, 0])   # per-core partial sums live at [c*8, 0]
    total_cnt = jnp.sum(acc[:, 1])   # per-core partial counts live at [c*8, 1]
    # nanmean = sum(non-nan) / count(non-nan); 0/0 -> nan matches torch.nanmean
    return (total_sum / total_cnt).astype(jnp.float32)


if __name__ == "__main__":
    key = jax.random.PRNGKey(0)
    k1, k2 = jax.random.split(key)

    B, C = 10, 128  # [batch_size, num_cls]; B not tile-aligned -> exercises the masked tail path
    # logits in (0, 1) as the loss formula assumes probabilities
    logits = jax.random.uniform(k1, (B, C), dtype=jnp.float32, minval=0.01, maxval=0.99)
    # multi-hot ground-truth labels
    target = (jax.random.uniform(k2, (B, C), dtype=jnp.float32) > 0.5).astype(jnp.float32)
    # inject NaNs to exercise the nanmean path
    logits = logits.at[1, 3].set(jnp.nan).at[7, 100].set(jnp.nan)

    alpha = 0.7
    out = bce_aw_loss(logits, target, alpha=alpha)
    jax.block_until_ready(out)

    # pure-JAX reference for sanity
    eps = 1e-9
    ref_loss = -alpha * target * (1.0 - logits) * jnp.log(logits + eps)
    ref_loss = ref_loss + (-(1.0 - alpha)) * (1.0 - target) * logits * jnp.log(1.0 - logits + eps)
    ref = jnp.nanmean(ref_loss)

    assert jnp.allclose(out, ref, rtol=1e-5, atol=1e-6), (out, ref)
    print("KERNEL_OK")
</pallas_src>

<mosaic_0001>
module attributes {stable_mosaic.version = 11 : i64} {
  func.func @kernel(%arg0: i32, %arg1: i32, %arg2: memref<8x128xf32, #tpu.memory_space<vmem>>, %arg3: memref<8x128xf32, #tpu.memory_space<vmem>>, %arg4: memref<8x128xf32, #tpu.memory_space<vmem>>) attributes {dimension_semantics = [#tpu.dimension_semantics<parallel>, #tpu.dimension_semantics<arbitrary>], iteration_bounds = array<i64: 2, 1>, scalar_prefetch = 0 : i64, scratch_operands = 0 : i64, tpu.core_type = #tpu.core_type<tc>, window_params = [{transform_indices = @transform_0, window_bounds = array<i64: 8, 128>}, {transform_indices = @transform_1, window_bounds = array<i64: 8, 128>}, {transform_indices = @transform_2, window_bounds = array<i64: 8, 128>}]} {
    %c0_i32 = arith.constant 0 : i32
    %0 = arith.cmpi eq, %arg1, %c0_i32 : i32
    %1 = arith.extui %0 : i1 to i32
    %c0_i32_0 = arith.constant 0 : i32
    %2 = arith.cmpi ne, %1, %c0_i32_0 : i32
    scf.if %2 {
      %cst_23 = arith.constant 0.000000e+00 : f32
      %69 = vector.broadcast %cst_23 : f32 to vector<8x128xf32>
      %c0_24 = arith.constant 0 : index
      %c0_25 = arith.constant 0 : index
      %70 = vector.load %arg4[%c0_24, %c0_25] : memref<8x128xf32, #tpu.memory_space<vmem>>, vector<8x128xf32>
      tpu.vector_store %arg4[%c0_24, %c0_25], %69 {strides = array<i32>} : memref<8x128xf32, #tpu.memory_space<vmem>>, vector<8x128xf32>,
    } else {
    }
    %c0 = arith.constant 0 : index
    %c0_1 = arith.constant 0 : index
    %3 = vector.load %arg2[%c0, %c0_1] : memref<8x128xf32, #tpu.memory_space<vmem>>, vector<8x128xf32>
    %c0_2 = arith.constant 0 : index
    %c0_3 = arith.constant 0 : index
    %4 = vector.load %arg3[%c0_2, %c0_3] : memref<8x128xf32, #tpu.memory_space<vmem>>, vector<8x128xf32>
    %cst = arith.constant -0.699999988 : f32
    %5 = vector.broadcast %cst : f32 to vector<8x128xf32>
    %6 = arith.mulf %5, %4 : vector<8x128xf32>
    %cst_4 = arith.constant 1.000000e+00 : f32
    %7 = vector.broadcast %cst_4 : f32 to vector<8x128xf32>
    %8 = arith.subf %7, %3 : vector<8x128xf32>
    %9 = arith.mulf %6, %8 : vector<8x128xf32>
    %cst_5 = arith.constant 9.99999971E-10 : f32
    %10 = vector.broadcast %cst_5 : f32 to vector<8x128xf32>
    %11 = arith.addf %3, %10 : vector<8x128xf32>
    %12 = math.log %11 : vector<8x128xf32>
    %13 = arith.mulf %9, %12 : vector<8x128xf32>
    %cst_6 = arith.constant 1.000000e+00 : f32
    %14 = vector.broadcast %cst_6 : f32 to vector<8x128xf32>
    %15 = arith.subf %14, %4 : vector<8x128xf32>
    %cst_7 = arith.constant -3.000000e-01 : f32
    %16 = vector.broadcast %cst_7 : f32 to vector<8x128xf32>
    %17 = arith.mulf %16, %15 : vector<8x128xf32>
    %18 = arith.mulf %17, %3 : vector<8x128xf32>
    %cst_8 = arith.constant 1.000000e+00 : f32
    %19 = vector.broadcast %cst_8 : f32 to vector<8x128xf32>
    %20 = arith.subf %19, %3 : vector<8x128xf32>
    %cst_9 = arith.constant 9.99999971E-10 : f32
    %21 = vector.broadcast %cst_9 : f32 to vector<8x128xf32>
    %22 = arith.addf %20, %21 : vector<8x128xf32>
    %23 = math.log %22 : vector<8x128xf32>
    %24 = arith.mulf %18, %23 : vector<8x128xf32>
    %25 = arith.addf %13, %24 : vector<8x128xf32>
    %c1_i32 = arith.constant 1 : i32
    %26 = arith.muli %arg0, %c1_i32 : i32
    %27 = arith.addi %26, %arg1 : i32
    %c8_i32 = arith.constant 8 : i32
    %28 = arith.muli %27, %c8_i32 : i32
    %29 = tpu.iota {dimensions = array<i32: 0>} : vector<8x128xi32>
    %30 = vector.broadcast %28 : i32 to vector<8x128xi32>
    %31 = arith.addi %30, %29 : vector<8x128xi32>
    %c10_i32 = arith.constant 10 : i32
    %32 = vector.broadcast %c10_i32 : i32 to vector<8x128xi32>
    %33 = arith.cmpi slt, %31, %32 : vector<8x128xi32>
    %34 = arith.cmpf one, %25, %25 : vector<8x128xf32>
    %cst_10 = arith.constant dense<true> : vector<8x128xi1>
    %35 = arith.xori %34, %cst_10 : vector<8x128xi1>
    %36 = arith.andi %33, %35 : vector<8x128xi1>
    %cst_11 = arith.constant 0.000000e+00 : f32
    %37 = vector.broadcast %cst_11 : f32 to vector<8x128xf32>
    %38 = arith.select %36, %25, %37 : vector<8x128xi1>, vector<8x128xf32>
    %39 = vector.shape_cast %38 : vector<8x128xf32> to vector<1x8x128xf32>
    %cst_12 = arith.constant dense<0.000000e+00> : vector<1xf32>
    %40 = vector.multi_reduction <add>, %39, %cst_12 [1, 2] : vector<1x8x128xf32> to vector<1xf32>
    %41 = vector.shape_cast %40 : vector<1xf32> to vector<1x1x1xf32>
    %42 = vector.extract %41[0, 0, 0] : f32 from vector<1x1x1xf32>
    %43 = arith.extui %36 : vector<8x128xi1> to vector<8x128xi32>
    %44 = arith.sitofp %43 : vector<8x128xi32> to vector<8x128xf32>
    %45 = vector.shape_cast %44 : vector<8x128xf32> to vector<1x8x128xf32>
    %cst_13 = arith.constant dense<0.000000e+00> : vector<1xf32>
    %46 = vector.multi_reduction <add>, %45, %cst_13 [1, 2] : vector<1x8x128xf32> to vector<1xf32>
    %47 = vector.shape_cast %46 : vector<1xf32> to vector<1x1x1xf32>
    %48 = vector.extract %47[0, 0, 0] : f32 from vector<1x1x1xf32>
    %49 = tpu.iota {dimensions = array<i32: 0>} : vector<8x128xi32>
    %50 = tpu.iota {dimensions = array<i32: 1>} : vector<8x128xi32>
    %c0_i32_14 = arith.constant 0 : i32
    %51 = vector.broadcast %c0_i32_14 : i32 to vector<8x128xi32>
    %52 = arith.cmpi eq, %49, %51 : vector<8x128xi32>
    %c0_i32_15 = arith.constant 0 : i32
    %53 = vector.broadcast %c0_i32_15 : i32 to vector<8x128xi32>
    %54 = arith.cmpi eq, %50, %53 : vector<8x128xi32>
    %55 = arith.andi %52, %54 : vector<8x128xi1>
    %c0_i32_16 = arith.constant 0 : i32
    %56 = vector.broadcast %c0_i32_16 : i32 to vector<8x128xi32>
    %57 = arith.cmpi eq, %49, %56 : vector<8x128xi32>
    %c1_i32_17 = arith.constant 1 : i32
    %58 = vector.broadcast %c1_i32_17 : i32 to vector<8x128xi32>
    %59 = arith.cmpi eq, %50, %58 : vector<8x128xi32>
    %60 = arith.andi %57, %59 : vector<8x128xi1>
    %cst_18 = arith.constant 0.000000e+00 : f32
    %61 = vector.broadcast %48 : f32 to vector<8x128xf32>
    %62 = vector.broadcast %cst_18 : f32 to vector<8x128xf32>
    %63 = arith.select %60, %61, %62 : vector<8x128xi1>, vector<8x128xf32>
    %64 = vector.broadcast %42 : f32 to vector<8x128xf32>
    %65 = arith.select %55, %64, %63 : vector<8x128xi1>, vector<8x128xf32>
    %c0_19 = arith.constant 0 : index
    %c0_20 = arith.constant 0 : index
    %66 = vector.load %arg4[%c0_19, %c0_20] : memref<8x128xf32, #tpu.memory_space<vmem>>, vector<8x128xf32>
    %67 = arith.addf %66, %65 : vector<8x128xf32>
    %c0_21 = arith.constant 0 : index
    %c0_22 = arith.constant 0 : index
    %68 = vector.load %arg4[%c0_21, %c0_22] : memref<8x128xf32, #tpu.memory_space<vmem>>, vector<8x128xf32>
    tpu.vector_store %arg4[%c0_21, %c0_22], %67 {strides = array<i32>} : memref<8x128xf32, #tpu.memory_space<vmem>>, vector<8x128xf32>,
    return
  }
  func.func @transform_0(%arg0: i32, %arg1: i32) -> (i32, i32) {
    %c1_i32 = arith.constant 1 : i32
    %0 = arith.muli %arg0, %c1_i32 : i32
    %1 = arith.addi %0, %arg1 : i32
    %c1_i32_0 = arith.constant 1 : i32
    %2 = arith.minsi %1, %c1_i32_0 : i32
    %c0_i32 = arith.constant 0 : i32
    %c0_i32_1 = arith.constant 0 : i32
    return %2, %c0_i32 : i32, i32
  }
  func.func @transform_1(%arg0: i32, %arg1: i32) -> (i32, i32) {
    %c1_i32 = arith.constant 1 : i32
    %0 = arith.muli %arg0, %c1_i32 : i32
    %1 = arith.addi %0, %arg1 : i32
    %c1_i32_0 = arith.constant 1 : i32
    %2 = arith.minsi %1, %c1_i32_0 : i32
    %c0_i32 = arith.constant 0 : i32
    %c0_i32_1 = arith.constant 0 : i32
    return %2, %c0_i32 : i32, i32
  }
  func.func @transform_2(%arg0: i32, %arg1: i32) -> (i32, i32) {
    %c0_i32 = arith.constant 0 : i32
    %c0_i32_0 = arith.constant 0 : i32
    return %arg0, %c0_i32 : i32, i32
  }
}

</mosaic_0001>

<llo_original>
// kernel: tpu_custom_call.1
$region0: #{tpu_custom_call.1}
  #allocation0 [shape = 'u32[]', space=smem, size = 0x4, offset = 0x4, fixed_abs, tag = 'smem constant byte address 0x4 - core index']
  #allocation1 [shape = 'u32[72,128]{1,0:T(1,128)}', space=vmem, size = 0x9000, scoped, tag = 'internal scratch']
  %s0 = inlined_call_operand.hbm [shape: f32[10,128], index: 0, kind: input, shape index: {}]
  %s1 = inlined_call_operand.hbm [shape: f32[10,128], index: 1, kind: input, shape index: {}]
  %s2 = inlined_call_operand.hbm [shape: f32[16,128], index: 2, kind: output, shape index: {}]
  %s3 = sld [smem:[#allocation0]]
  $region53: #{tpu_custom_call.1} parent=0
    _
  %s5 = ssub.s32 1, %s3
  %s6 = scalar_select 0, %s5, %s3
  $region1: #{tpu_custom_call.1} parent=0
    #allocation2 [shape = 'u8[8192]{0}', space=vmem, size = 0x2000, scoped, tag = 'input window, operand 0']
    #allocation3 [shape = 's32[2]{0}', space=sflag, size = 0x8, scoped, tag = 'scoped memory for tpu_custom_call.1']
    #allocation4 [shape = 's32[2]{0}', space=sflag, size = 0x8, scoped, tag = 'scoped memory for tpu_custom_call.1']
    #allocation5 [shape = 'u8[8192]{0}', space=vmem, size = 0x2000, scoped, tag = 'input window, operand 1']
    #allocation6 [shape = 's32[2]{0}', space=sflag, size = 0x8, scoped, tag = 'scoped memory for tpu_custom_call.1']
    #allocation7 [shape = 'u8[8192]{0}', space=vmem, size = 0x2000, scoped, tag = 'output window, operand 0']
    %7 = vsyncpa [#allocation3], 0
    %s8 = scalar_lea.sflag [#allocation3], 1
    %9 = vsyncpa %s8, 0
    %10 = vsyncpa [#allocation6], 0
    %s11 = scalar_lea.sflag [#allocation6], 1
    %12 = vsyncpa %s11, 0
    %13 = vsyncpa [#allocation4], 0
    %s14 = scalar_lea.sflag [#allocation4], 1
    %15 = vsyncpa %s14, 0
    loop: start=0, step=1, limit=4
    $region2: #{tpu_custom_call.1} parent=1 // loop_pre_header
      _
    $region3: #{tpu_custom_call.1} parent=1 // loop_header
      %s17 = sphi 0, %s21
      %p18 = scmp.ge.s32.totalorder %s17, 4
      %s24 = sphi 0, %s36
      %s25 = sphi 0, %s32
      %s26 = sphi 0, %s24
      %s27 = sphi 0, %s25
      %s28 = sphi 0, %s26
      %s29 = sphi 0, %s27
      %s45 = sphi 0, %s47
      %s48 = sphi 0, %s45
      %s49 = sphi 0, %s48
      %s65 = sphi 0, %s49
      %s77 = sphi 0, %s79
      %s80 = sphi 0, %s77
      %s81 = sphi 0, %s80
      %s97 = sphi 0, %s81
      %s103 = sphi 0, %s105
      %s106 = sphi 0, %s103
      %s107 = sphi 0, %s106
      %s123 = sphi 0, %s107
    $region4: #{tpu_custom_call.1} parent=1 // loop_header_branch
      %20 = sbr.rel (%p18) target = $region8
    $region5: #{tpu_custom_call.1} parent=1 // loop_body
      %s22 = ssub.s32 %s17, 1
      %s23 = ssub.s32 %s17, 2
      %s30 = sadd.s32 1, %s25
      %p31 = scmp.ge.s32.totalorder %s30, 1
      %s32 = scalar_select %p31, 0, %s30
      %s33 = sadd.s32 1, %s24
      %s34 = scalar_select %p31, %s33, %s24
      %p35 = scmp.ge.s32.totalorder %s34, 2
      %s36 = scalar_select %p35, 0, %s34
      %s37 = sadd.s32 %s24, %s25
      %p38 = scmp.lt.s32.totalorder %s37, 1
      %s39 = scalar_select %p38, %s37, 1
      %s40 = sadd.s32 %s36, %s32
      %p41 = scmp.lt.s32.totalorder %s40, 1
      %s42 = scalar_select %p41, %s40, 1
      %s43 = ssub.s32 %s39, %s42
      %p44 = scmp.eq.s32.totalorder %s43, 0
      %s46 = sadd.s32 %s45, 1
      %s47 = scalar_select %p44, %s45, %s46
      %p50 = pneg %p44
      %p51 = scmp.eq.s32.totalorder %s17, 1
      %p52 = por %p50, %p51
      %p53 = scmp.ne.s32.totalorder %s45, %s48
      %p54 = scmp.eq.s32.totalorder %s17, 0
      %p55 = por %p53, %p54
      %p56 = scmp.ne.s32.totalorder %s45, %s48
      %p57 = scmp.eq.s32.totalorder %s22, 1
      %p58 = por %p56, %p57
      %p59 = scmp.ne.s32.totalorder %s48, %s49
      %p60 = scmp.eq.s32.totalorder %s22, 0
      %p61 = por %p59, %p60
      %p62 = scmp.ne.s32.totalorder %s48, %s49
      %p63 = scmp.eq.s32.totalorder %s23, 1
      %p64 = por %p62, %p63
      %p66 = scmp.ne.s32.totalorder %s49, %s65
      %p67 = scmp.eq.s32.totalorder %s23, 0
      %p68 = por %p66, %p67
      %s69 = sadd.s32 %s24, %s25
      %p70 = scmp.lt.s32.totalorder %s69, 1
      %s71 = scalar_select %p70, %s69, 1
      %s72 = sadd.s32 %s36, %s32
      %p73 = scmp.lt.s32.totalorder %s72, 1
      %s74 = scalar_select %p73, %s72, 1
      %s75 = ssub.s32 %s71, %s74
      %p76 = scmp.eq.s32.totalorder %s75, 0
      %s78 = sadd.s32 %s77, 1
      %s79 = scalar_select %p76, %s77, %s78
      %p82 = pneg %p76
      %p83 = scmp.eq.s32.totalorder %s17, 1
      %p84 = por %p82, %p83
      %p85 = scmp.ne.s32.totalorder %s77, %s80
      %p86 = scmp.eq.s32.totalorder %s17, 0
      %p87 = por %p85, %p86
      %p88 = scmp.ne.s32.totalorder %s77, %s80
      %p89 = scmp.eq.s32.totalorder %s22, 1
      %p90 = por %p88, %p89
      %p91 = scmp.ne.s32.totalorder %s80, %s81
      %p92 = scmp.eq.s32.totalorder %s22, 0
      %p93 = por %p91, %p92
      %p94 = scmp.ne.s32.totalorder %s80, %s81
      %p95 = scmp.eq.s32.totalorder %s23, 1
      %p96 = por %p94, %p95
      %p98 = scmp.ne.s32.totalorder %s81, %s97
      %p99 = scmp.eq.s32.totalorder %s23, 0
      %p100 = por %p98, %p99
      %s101 = ssub.s32 %s24, %s36
      %p102 = scmp.eq.s32.totalorder %s101, 0
      %s104 = sadd.s32 %s103, 1
      %s105 = scalar_select %p102, %s103, %s104
      %p108 = pneg %p102
      %p109 = scmp.eq.s32.totalorder %s17, 1
      %p110 = por %p108, %p109
      %p111 = scmp.ne.s32.totalorder %s103, %s106
      %p112 = scmp.eq.s32.totalorder %s17, 0
      %p113 = por %p111, %p112
      %p114 = scmp.ne.s32.totalorder %s103, %s106
      %p115 = scmp.eq.s32.totalorder %s22, 1
      %p116 = por %p114, %p115
      %p117 = scmp.ne.s32.totalorder %s106, %s107
      %p118 = scmp.eq.s32.totalorder %s22, 0
      %p119 = por %p117, %p118
      %p120 = scmp.ne.s32.totalorder %s106, %s107
      %p121 = scmp.eq.s32.totalorder %s23, 1
      %p122 = por %p120, %p121
      %p124 = scmp.ne.s32.totalorder %s107, %s123
      %p125 = scmp.eq.s32.totalorder %s23, 0
      %p126 = por %p124, %p125
      %p127 = scmp.le.s32.totalorder 1, %s17
      %p128 = scmp.lt.s32.totalorder %s17, 3
      %p129 = pnand %p127, %p128
      %p130 = pneg %p129
      // Predicated region
      $region9: #{tpu_custom_call.1} parent=5 // pred_check
        _
      $region10: #{tpu_custom_call.1} parent=5 // pred_check_branch
        %132 = sbr.rel (%p129) target = $region12
      $region11: #{tpu_custom_call.1} parent=5 // pred_region
        %s133 = ssub.s32 %s17, 1
      $region12: #{tpu_custom_call.1} parent=5 // pred_fallthru
        _
      %p134 = scmp.lt.s32.totalorder %s17, 2
      // Predicated region
      $region13: #{tpu_custom_call.1} parent=5 // pred_check
        %p135 = pneg %p134
      $region14: #{tpu_custom_call.1} parent=5 // pred_check_branch
        %137 = sbr.rel (%p135) target = $region16
      $region15: #{tpu_custom_call.1} parent=5 // pred_region
        // Predicated region
        $region17: #{tpu_custom_call.1} parent=15 // pred_check
          %p138 = pneg %p55
        $region18: #{tpu_custom_call.1} parent=15 // pred_check_branch
          %140 = sbr.rel (%p138) target = $region20
        $region19: #{tpu_custom_call.1} parent=15 // pred_region
          %s141 = sand.u32 %s45, 1
          %s142 = scalar_lea.sflag [#allocation3], %s141
          %s143 = sand.u32 %s45, 1
          %s144 = smul.addr %s143, 8
          %s145 = scalar_lea.vmem [#allocation2], %s144
          %s146 = sadd.s32 %s24, %s25
          %p147 = scmp.lt.s32.totalorder %s146, 1
          %s148 = scalar_select %p147, %s146, 1
          %150 = vsyncadd %s142, 0
          %s151 = smul.addr %s148, 8
          %s152 = scalar_lea.hbm %s0, %s151
          %s154 = sshll.u32 %s152, 4
          %s155 = int_to_ptr.hbm [resolvable:$true] %s154
          %s156 = sshll.u32 %s145, 4
          %s157 = int_to_ptr.vmem [resolvable:$true] %s156
          %159 = dma.hbm_to_vmem [thread:$0]  %s155, 128, %s157, %s142
        $region20: #{tpu_custom_call.1} parent=15 // pred_fallthru
          _
        // Predicated region
        $region21: #{tpu_custom_call.1} parent=15 // pred_check
          %p160 = pneg %p87
        $region22: #{tpu_custom_call.1} parent=15 // pred_check_branch
          %162 = sbr.rel (%p160) target = $region24
        $region23: #{tpu_custom_call.1} parent=15 // pred_region
          %s163 = sand.u32 %s77, 1
          %s164 = scalar_lea.sflag [#allocation6], %s163
          %s165 = sand.u32 %s77, 1
          %s166 = smul.addr %s165, 8
          %s167 = scalar_lea.vmem [#allocation5], %s166
          %s168 = sadd.s32 %s24, %s25
          %p169 = scmp.lt.s32.totalorder %s168, 1
          %s170 = scalar_select %p169, %s168, 1
          %172 = vsyncadd %s164, 0
          %s173 = smul.addr %s170, 8
          %s174 = scalar_lea.hbm %s1, %s173
          %s176 = sshll.u32 %s174, 4
          %s177 = int_to_ptr.hbm [resolvable:$true] %s176
          %s178 = sshll.u32 %s167, 4
          %s179 = int_to_ptr.vmem [resolvable:$true] %s178
          %181 = dma.hbm_to_vmem [thread:$0]  %s177, 128, %s179, %s164
        $region24: #{tpu_custom_call.1} parent=15 // pred_fallthru
          _
      $region16: #{tpu_custom_call.1} parent=5 // pred_fallthru
        _
      %p182 = scmp.le.s32.totalorder 1, %s17
      %p183 = scmp.lt.s32.totalorder %s17, 3
      %p184 = pnand %p182, %p183
      %p185 = pneg %p184
      // Predicated region
      $region25: #{tpu_custom_call.1} parent=5 // pred_check
        _
      $region26: #{tpu_custom_call.1} parent=5 // pred_check_branch
        %187 = sbr.rel (%p184) target = $region28
      $region27: #{tpu_custom_call.1} parent=5 // pred_region
        %s188 = ssub.s32 %s17, 1
        %s189 = sand.u32 %s48, 1
        %s190 = scalar_lea.sflag [#allocation3], %s189
        %s191 = sand.u32 %s48, 1
        %s192 = smul.addr %s191, 8
        %s193 = scalar_lea.vmem [#allocation2], %s192
        // Predicated region
        $region29: #{tpu_custom_call.1} parent=27 // pred_check
          %p194 = pneg %p61
        $region30: #{tpu_custom_call.1} parent=27 // pred_check_branch
          %196 = sbr.rel (%p194) target = $region32
        $region31: #{tpu_custom_call.1} parent=27 // pred_region
          %198 = dma.done %s190, 128
        $region32: #{tpu_custom_call.1} parent=27 // pred_fallthru
          _
        %s199 = sand.u32 %s80, 1
        %s200 = scalar_lea.sflag [#allocation6], %s199
        %s201 = sand.u32 %s80, 1
        %s202 = smul.addr %s201, 8
        %s203 = scalar_lea.vmem [#allocation5], %s202
        // Predicated region
        $region33: #{tpu_custom_call.1} parent=27 // pred_check
          %p204 = pneg %p93
        $region34: #{tpu_custom_call.1} parent=27 // pred_check_branch
          %206 = sbr.rel (%p204) target = $region36
        $region35: #{tpu_custom_call.1} parent=27 // pred_region
          %208 = dma.done %s200, 128
        $region36: #{tpu_custom_call.1} parent=27 // pred_fallthru
          _
        %s209 = sand.u32 %s48, 1
        %s210 = scalar_lea.sflag [#allocation3], %s209
        %s211 = sand.u32 %s48, 1
        %s212 = smul.addr %s211, 8
        %s213 = scalar_lea.vmem [#allocation2], %s212
        %p214 = pneg %p61
        %p215 = pneg %p58
        %s216 = sand.u32 %s80, 1
        %s217 = scalar_lea.sflag [#allocation6], %s216
        %s218 = sand.u32 %s80, 1
        %s219 = smul.addr %s218, 8
        %s220 = scalar_lea.vmem [#allocation5], %s219
        %p221 = pneg %p93
        %p222 = pneg %p90
        %p223 = pneg %p119
        %p224 = pneg %p116
        %s225 = sand.u32 %s106, 1
        %s226 = scalar_lea.sflag [#allocation4], %s225
        %s227 = sand.u32 %s106, 1
        %s228 = smul.addr %s227, 8
        %s229 = scalar_lea.vmem [#allocation7], %s228
        %s230 = sadd.s32 %s26, %s27
        %p231 = scmp.lt.s32.totalorder %s230, 1
        %s232 = scalar_select %p231, %s230, 1
        %s233 = sadd.s32 %s26, %s27
        %p234 = scmp.lt.s32.totalorder %s233, 1
        %s235 = scalar_select %p234, %s233, 1
        %p236 = scmp.eq.s32.totalorder %s27, 0
        // Predicated region
        $region37: #{tpu_custom_call.1} parent=27 // pred_check
          %p237 = pneg %p236
        $region38: #{tpu_custom_call.1} parent=27 // pred_check_branch
          %239 = sbr.rel (%p237) target = $region40
        $region39: #{tpu_custom_call.1} parent=27 // pred_region
          %240 = vst [vmem:[%s229] sm:$0xff] 0.0
        $region40: #{tpu_custom_call.1} parent=27 // pred_fallthru
          _
        %v241 = vld [vmem:[%s193] sm:$0xff]
        %v242 = vld [vmem:[%s203] sm:$0xff]
        %v243 = vmul.f32 %v242, -0.7
        %v244 = vsub.f32 1.0, %v241
        %v245 = vmul.f32 %v243, %v244
        %v246 = vadd.f32 %v241, 1e-09
        %v247 = vlog2.pop %v246
        %v248 = vmul.f32 %v247, 0.6931472
        %v249 = vmul.f32 %v245, %v248
        %v250 = vsub.f32 1.0, %v242
        %v251 = vmul.f32 %v250, -0.3
        %v252 = vmul.f32 %v251, %v241
        %v253 = vadd.f32 %v244, 1e-09
        %v254 = vlog2.pop %v253
        %v255 = vmul.f32 %v254, 0.6931472
        %v256 = vmul.f32 %v252, %v255
        %v257 = vadd.f32 %v249, %v256
        %s258 = sadd.s32 %s26, %s27
        %s259 = smul.u32 %s258, 8
        %v260 = vlaneseq
        %v261 = vshrl.u32 %v260, 7
        %v262 = vstv %s259
        %v263 = vadd.s32 %v262, %v261
        %vm264 = vcmp.lt.s32.totalorder %v263, 10
        %vm265 = vcmp.ne.f32.partialorder %v257, %v257
        %vm266 = vmxor %vm265, 1
        %vm267 = vmand %vm264, %vm266
        %v268 = vsel %vm267, %v257, 0.0
        %269 = vadd.xlane.f32.xlu0 %v268
        %v270 = vpop.xlane.xlu0 %269
        %v271 = vrot.slane %v270, 4
        %v272 = vadd.f32 %v270, %v271
        %v273 = vrot.slane %v272, 2
        %v274 = vadd.f32 %v272, %v273
        %v275 = vrot.slane %v274, 1
        %v276 = vadd.f32 %v274, %v275
        %s277 = vtos %v276
        %v278 = vsel %vm267, 1, 0
        %v279 = vcvt.s32.f32 %v278
        %280 = vadd.xlane.f32.xlu0 %v279
        %v281 = vpop.xlane.xlu0 %280
        %v282 = vrot.slane %v281, 4
        %v283 = vadd.f32 %v281, %v282
        %v284 = vrot.slane %v283, 2
        %v285 = vadd.f32 %v283, %v284
        %v286 = vrot.slane %v285, 1
        %v287 = vadd.f32 %v285, %v286
        %s288 = vtos %v287
        %v289 = vlaneseq
        %v290 = vand.u32 %v289, 127
        %vm291 = vcmp.eq.s32.totalorder %v261, 0
        %vm292 = vcmp.eq.s32.totalorder %v290, 0
        %vm293 = vmand %vm291, %vm292
        %vm294 = vcmp.eq.s32.totalorder %v290, 1
        %vm295 = vmand %vm291, %vm294
        %v296 = vstv %s288
        %v297 = vsel %vm295, %v296, 0.0
        %v298 = vstv %s277
        %v299 = vsel %vm293, %v298, %v297
        %v300 = vld [vmem:[%s229] sm:$0xff]
        %v301 = vadd.f32 %v300, %v299
        %302 = vst [vmem:[%s229] sm:$0xff] %v301
        %s303 = sand.u32 %s106, 1
        %s304 = scalar_lea.sflag [#allocation4], %s303
        %s305 = sand.u32 %s106, 1
        %s306 = smul.addr %s305, 8
        %s307 = scalar_lea.vmem [#allocation7], %s306
        // Predicated region
        $region41: #{tpu_custom_call.1} parent=27 // pred_check
          %p308 = pneg %p116
        $region42: #{tpu_custom_call.1} parent=27 // pred_check_branch
          %310 = sbr.rel (%p308) target = $region44
        $region43: #{tpu_custom_call.1} parent=27 // pred_region
          %312 = vsyncadd %s304, 0
          %s313 = smul.addr %s26, 8
          %s314 = scalar_lea.hbm %s2, %s313
          %s316 = sshll.u32 %s307, 4
          %s317 = int_to_ptr.vmem [resolvable:$true] %s316
          %s318 = sshll.u32 %s314, 4
          %s319 = int_to_ptr.hbm [resolvable:$true] %s318
          %321 = dma.vmem_to_hbm [thread:$0]  %s317, 128, %s319, %s304
        $region44: #{tpu_custom_call.1} parent=27 // pred_fallthru
          _
      $region28: #{tpu_custom_call.1} parent=5 // pred_fallthru
        _
      %p322 = scmp.le.s32.totalorder 2, %s17
      // Predicated region
      $region45: #{tpu_custom_call.1} parent=5 // pred_check
        %p323 = pneg %p322
      $region46: #{tpu_custom_call.1} parent=5 // pred_check_branch
        %325 = sbr.rel (%p323) target = $region48
      $region47: #{tpu_custom_call.1} parent=5 // pred_region
        %s326 = ssub.s32 %s17, 2
        // Predicated region
        $region49: #{tpu_custom_call.1} parent=47 // pred_check
          %p327 = pneg %p122
        $region50: #{tpu_custom_call.1} parent=47 // pred_check_branch
          %329 = sbr.rel (%p327) target = $region52
        $region51: #{tpu_custom_call.1} parent=47 // pred_region
          %s330 = sand.u32 %s107, 1
          %s331 = scalar_lea.sflag [#allocation4], %s330
          %s332 = sand.u32 %s107, 1
          %s333 = smul.addr %s332, 8
          %s334 = scalar_lea.vmem [#allocation7], %s333
          %336 = dma.done %s331, 128
        $region52: #{tpu_custom_call.1} parent=47 // pred_fallthru
          _
      $region48: #{tpu_custom_call.1} parent=5 // pred_fallthru
        _
    $region6: #{tpu_custom_call.1} parent=1 // loop_footer
      %s21 = sadd.s32 1, %s17
    $region7: #{tpu_custom_call.1} parent=1 // loop_footer_branch
      %16 = sbr.rel target = $region3
    $region8: #{tpu_custom_call.1} parent=1 // loop_exit
      _
    %337 = vsyncpa [#allocation3], 1
    %s338 = scalar_lea.sflag [#allocation3], 1
    %339 = vsyncpa %s338, 1
    %340 = vsyncpa [#allocation6], 1
    %s341 = scalar_lea.sflag [#allocation6], 1
    %342 = vsyncpa %s341, 1
    %343 = vsyncpa [#allocation4], 1
    %s344 = scalar_lea.sflag [#allocation4], 1
    %345 = vsyncpa %s344, 1

</llo_original>
